<compile_context>
chip_gen: v7x
topology: tpu7x:2x2x1
jax: 0.10.0
libtpu: 0.0.40
codegen_flags: <defaults>
</compile_context>

<pallas_src>
import functools

import jax
import jax.numpy as jnp
from jax.experimental import pallas as pl
from jax.experimental.pallas import tpu as pltpu


# ---------------------- fused MLP heads + deltas + KL ----------------------

def _heads_kernel(x2_ref, w1_ref, b1_ref, w2_ref, b2_ref,
                  epsb_ref, epsg_ref, bp_ref, gp_ref,
                  betas_ref, gammas_ref, kl_ref, o_scr, *, C):
    # Layer 1, all 4 heads at once: (1, T) @ (T, 4H) -> (1, 4H).
    h = jnp.dot(x2_ref[...], w1_ref[...], preferred_element_type=jnp.float32)
    h = jnp.maximum(h + b1_ref[...], 0.0)
    # Layer 2, block-diagonal weights: (1, 4H) @ (4H, 4C) -> (1, 4C).
    o_scr[...] = (
        jnp.dot(h, w2_ref[...], preferred_element_type=jnp.float32) + b2_ref[...]
    )

    # Head order: [beta_mu, beta_var, gamma_mu, gamma_var].
    d_beta_mu = o_scr[:, 0 * C:1 * C]
    d_beta_var = o_scr[:, 1 * C:2 * C]
    d_gamma_mu = o_scr[:, 2 * C:3 * C]
    d_gamma_var = o_scr[:, 3 * C:4 * C]

    # Reparameterized deltas (eps inputs already hold the mean of the
    # num_samples standard-normal draws).
    beta_delta = d_beta_mu + epsb_ref[...] * jnp.sqrt(jnp.exp(d_beta_var))
    gamma_delta = d_gamma_mu + epsg_ref[...] * jnp.sqrt(jnp.exp(d_gamma_var))
    betas_ref[...] = bp_ref[...] + beta_delta      # (B, C) + (1, C)
    gammas_ref[...] = gp_ref[...] + gamma_delta

    # KL(q(beta) || N(0, e)) as in the reference kl_div(mu, log_v, zeros, ones):
    #   log(v0) = 1 ; (m0 - m)^2 = mu^2 ; v0 = e.
    v = jnp.exp(d_beta_var)
    inv_e = jnp.exp(jnp.float32(-1.0))
    kl_ref[0, 0] = (
        -0.5 * float(C)
        + 0.5 * jnp.sum(1.0 - d_beta_var)
        + 0.5 * jnp.sum((v + d_beta_mu * d_beta_mu) * inv_e)
    )


def mlp_heads_fused(x2, w1cat, b1cat, w2bd, b2cat, eps_b, eps_g, betas_p, gammas_p):
    B, C = betas_p.shape
    vmem = pl.BlockSpec(memory_space=pltpu.MemorySpace.VMEM)
    smem = pl.BlockSpec(memory_space=pltpu.MemorySpace.SMEM)
    return pl.pallas_call(
        functools.partial(_heads_kernel, C=C),
        out_shape=(
            jax.ShapeDtypeStruct((B, C), jnp.float32),   # betas (per batch, channel)
            jax.ShapeDtypeStruct((B, C), jnp.float32),   # gammas
            jax.ShapeDtypeStruct((1, 1), jnp.float32),   # KL
        ),
        in_specs=[vmem] * 9,
        out_specs=(vmem, vmem, smem),
        scratch_shapes=[pltpu.VMEM((1, 4 * C), jnp.float32)],
    )(x2, w1cat, b1cat, w2bd, b2cat, eps_b, eps_g, betas_p, gammas_p)


# -------------- fused global-stats + normalization (2-phase grid) ----------

def _cbn_stat_norm_kernel(x_ref, g_ref, b_ref, out_ref, stat_ref, *, n, eps):
    phase = pl.program_id(0)
    tile = pl.program_id(1)

    @pl.when((phase == 0) & (tile == 0))
    def _init():
        stat_ref[0] = jnp.float32(0.0)   # running sum
        stat_ref[1] = jnp.float32(0.0)   # running sum of squares

    @pl.when(phase == 0)
    def _accumulate():
        x = x_ref[...]
        stat_ref[0] += jnp.sum(x)
        stat_ref[1] += jnp.sum(x * x)

    @pl.when(phase == 1)
    def _normalize():
        mean = stat_ref[0] / n
        # NOTE: sumsq - n*mean^2 can cancel in f32 for very large n / strongly
        # offset data; at that scale switch to a centered second pass.
        var = (stat_ref[1] - n * mean * mean) / (n - 1.0)   # torch.var: unbiased
        rstd = jax.lax.rsqrt(var + eps)
        a = g_ref[...] * rstd                 # (row_tile, 1)
        b = b_ref[...] - mean * a             # (row_tile, 1)
        out_ref[...] = x_ref[...] * a + b     # 2 VPU ops / element


def _choose_row_tile(R, L, budget_bytes=16 * 1024 * 1024):
    # x-input block + output block, each double-buffered: ~4 * row_tile * L * 4 B.
    per_row_bytes = 4 * 4 * L
    max_rows = max(8, budget_bytes // per_row_bytes)
    row_tile = min(R, int(max_rows))
    row_tile = max(8, (row_tile // 8) * 8)
    return row_tile


def cbn_normalize_fused(x2d, gamma_col, beta_col, *, n_elems, eps):
    R, L = x2d.shape
    row_tile = _choose_row_tile(R, L)
    R_pad = ((R + row_tile - 1) // row_tile) * row_tile
    if R_pad != R:
        # Zero rows contribute 0 to sum/sumsq (true n is passed separately);
        # padded output rows are sliced off below.
        pad = ((0, R_pad - R), (0, 0))
        x2d = jnp.pad(x2d, pad)
        gamma_col = jnp.pad(gamma_col, pad)
        beta_col = jnp.pad(beta_col, pad)
    num_tiles = R_pad // row_tile

    out = pl.pallas_call(
        functools.partial(_cbn_stat_norm_kernel, n=float(n_elems), eps=float(eps)),
        out_shape=jax.ShapeDtypeStruct((R_pad, L), jnp.float32),
        grid=(2, num_tiles),                               # (phase, row tile)
        in_specs=[
            pl.BlockSpec((row_tile, L), lambda p, t: (t, 0)),
            pl.BlockSpec((row_tile, 1), lambda p, t: (t * p, 0)),  # only used in phase 1
            pl.BlockSpec((row_tile, 1), lambda p, t: (t * p, 0)),
        ],
        # Output block stays parked at tile 0 during phase 0 (no garbage
        # writeback), then follows the row tiles in phase 1.
        out_specs=pl.BlockSpec((row_tile, L), lambda p, t: (t * p, 0)),
        scratch_shapes=[pltpu.SMEM((2,), jnp.float32)],
        compiler_params=pltpu.CompilerParams(
            # TODO(synk): on v7x (2 TCs) the row-tile axis could be split per
            # core with per-core partial sums + a combine step; kept sequential
            # here because the phase-0 accumulator lives in per-core scratch.
            dimension_semantics=("arbitrary", "arbitrary"),
            vmem_limit_bytes=32 * 1024 * 1024,
        ),
    )(x2d, gamma_col, beta_col)
    return out[:R] if R_pad != R else out


# ----------------------------- parameter init -----------------------------

def xavier_uniform(key, shape):
    fan_out, fan_in = shape  # torch nn.Linear weight layout: (out_features, in_features)
    limit = (6.0 / (fan_in + fan_out)) ** 0.5
    return jax.random.uniform(key, shape, jnp.float32, -limit, limit)


def init_params(key, task2_size, hidden_size, out_size, batch_size):
    keys = jax.random.split(key, 8)
    w1_cols, w2_blocks = [], []
    # head order: [beta_mu, beta_var, gamma_mu, gamma_var]
    for h in range(4):
        W1 = xavier_uniform(keys[2 * h], (hidden_size, task2_size))
        W2 = xavier_uniform(keys[2 * h + 1], (out_size, hidden_size))
        w1_cols.append(W1.T)       # (T, H)
        w2_blocks.append(W2.T)     # (H, C)
    w1cat = jnp.concatenate(w1_cols, axis=1)                 # (T, 4H)
    b1cat = jnp.full((1, 4 * hidden_size), 0.1, jnp.float32)
    w2bd = jnp.zeros((4 * hidden_size, 4 * out_size), jnp.float32)
    for h in range(4):
        w2bd = w2bd.at[h * hidden_size:(h + 1) * hidden_size,
                       h * out_size:(h + 1) * out_size].set(w2_blocks[h])
    b2cat = jnp.full((1, 4 * out_size), 0.1, jnp.float32)
    return {
        "w1cat": w1cat, "b1cat": b1cat, "w2bd": w2bd, "b2cat": b2cat,
        "betas": jnp.zeros((batch_size, out_size), jnp.float32),
        "gammas": jnp.ones((batch_size, out_size), jnp.float32),
    }


# ------------------------------- forward ----------------------------------

def cbn_forward(params, task_1_feature, task_2_feature, sample_key,
                eps=1e-5, num_samples=100):
    B, C, H, W = task_1_feature.shape
    x2 = task_2_feature.reshape(1, -1).astype(jnp.float32)

    # The reference averages num_samples iid N(0,1) draws; that mean is itself
    # N(0, 1/num_samples), so draw it directly (statistically identical).
    kb, kg = jax.random.split(sample_key)
    scale = 1.0 / (float(num_samples) ** 0.5)
    eps_b = jax.random.normal(kb, (1, C), jnp.float32) * scale
    eps_g = jax.random.normal(kg, (1, C), jnp.float32) * scale

    # 4 MLP heads + deltas + per-(b,c) betas/gammas + KL, one Pallas call.
    betas_bc, gammas_bc, kl = mlp_heads_fused(
        x2, params["w1cat"], params["b1cat"], params["w2bd"], params["b2cat"],
        eps_b, eps_g, params["betas"], params["gammas"])

    # Fused global mean/var + conditional batch-norm, one Pallas call.
    x2d = task_1_feature.reshape(B * C, H * W).astype(jnp.float32)
    out2d = cbn_normalize_fused(
        x2d,
        gammas_bc.reshape(B * C, 1),
        betas_bc.reshape(B * C, 1),
        n_elems=B * C * H * W,
        eps=eps,
    )
    return out2d.reshape(B, C, H, W), kl[0, 0]


# --------------------------------- main ------------------------------------

if __name__ == "__main__":
    B, C, H, W = 2, 4, 16, 16
    task2_size, hidden_size, out_size = 16, 32, C

    key = jax.random.PRNGKey(0)
    k_params, k_x1, k_x2, k_sample = jax.random.split(key, 4)

    params = init_params(k_params, task2_size, hidden_size, out_size, B)
    task_1_feature = jax.random.normal(k_x1, (B, C, H, W), jnp.float32)
    task_2_feature = jax.random.normal(k_x2, (task2_size,), jnp.float32)

    fwd = jax.jit(cbn_forward)
    out, kl_loss = fwd(params, task_1_feature, task_2_feature, k_sample)
    jax.block_until_ready((out, kl_loss))

    assert out.shape == (B, C, H, W)
    assert kl_loss.shape == ()
    print("KERNEL_OK")
</pallas_src>

<mosaic_0001>
module attributes {stable_mosaic.version = 11 : i64} {
  func.func @_heads_kernel(%arg0: memref<1x16xf32, #tpu.memory_space<vmem>>, %arg1: memref<16x128xf32, #tpu.memory_space<vmem>>, %arg2: memref<1x128xf32, #tpu.memory_space<vmem>>, %arg3: memref<128x16xf32, #tpu.memory_space<vmem>>, %arg4: memref<1x16xf32, #tpu.memory_space<vmem>>, %arg5: memref<1x4xf32, #tpu.memory_space<vmem>>, %arg6: memref<1x4xf32, #tpu.memory_space<vmem>>, %arg7: memref<2x4xf32, #tpu.memory_space<vmem>>, %arg8: memref<2x4xf32, #tpu.memory_space<vmem>>, %arg9: memref<2x4xf32, #tpu.memory_space<vmem>>, %arg10: memref<2x4xf32, #tpu.memory_space<vmem>>, %arg11: memref<1x1xf32, #tpu.memory_space<smem>>, %arg12: memref<1x16xf32, #tpu.memory_space<vmem>>) attributes {dimension_semantics = [], scalar_prefetch = 0 : i64, scratch_operands = 1 : i64, tpu.core_type = #tpu.core_type<tc>} {
    %c0 = arith.constant 0 : index
    %c0_0 = arith.constant 0 : index
    %0 = vector.load %arg0[%c0, %c0_0] : memref<1x16xf32, #tpu.memory_space<vmem>>, vector<1x16xf32>
    %c0_1 = arith.constant 0 : index
    %c0_2 = arith.constant 0 : index
    %1 = vector.load %arg1[%c0_1, %c0_2] : memref<16x128xf32, #tpu.memory_space<vmem>>, vector<16x128xf32>
    %cst = arith.constant dense<0.000000e+00> : vector<1x128xf32>
    %2 = tpu.matmul %0, %1, %cst {dimension_numbers = #tpu.dot_dimension_numbers<[1], [0], [0], [1], [0, 0, 1, 1], [], []>} : vector<1x16xf32>, vector<16x128xf32>, vector<1x128xf32> -> vector<1x128xf32>
    %c0_3 = arith.constant 0 : index
    %c0_4 = arith.constant 0 : index
    %3 = vector.load %arg2[%c0_3, %c0_4] : memref<1x128xf32, #tpu.memory_space<vmem>>, vector<1x128xf32>
    %4 = arith.addf %2, %3 : vector<1x128xf32>
    %cst_5 = arith.constant 0.000000e+00 : f32
    %5 = vector.broadcast %cst_5 : f32 to vector<1x128xf32>
    %6 = arith.maximumf %4, %5 : vector<1x128xf32>
    %c0_6 = arith.constant 0 : index
    %c0_7 = arith.constant 0 : index
    %7 = vector.load %arg3[%c0_6, %c0_7] : memref<128x16xf32, #tpu.memory_space<vmem>>, vector<128x16xf32>
    %cst_8 = arith.constant dense<0.000000e+00> : vector<1x16xf32>
    %8 = tpu.matmul %6, %7, %cst_8 {dimension_numbers = #tpu.dot_dimension_numbers<[1], [0], [0], [1], [0, 0, 1, 1], [], []>} : vector<1x128xf32>, vector<128x16xf32>, vector<1x16xf32> -> vector<1x16xf32>
    %c0_9 = arith.constant 0 : index
    %c0_10 = arith.constant 0 : index
    %9 = vector.load %arg4[%c0_9, %c0_10] : memref<1x16xf32, #tpu.memory_space<vmem>>, vector<1x16xf32>
    %10 = arith.addf %8, %9 : vector<1x16xf32>
    %c0_11 = arith.constant 0 : index
    %c0_12 = arith.constant 0 : index
    %11 = vector.load %arg12[%c0_11, %c0_12] : memref<1x16xf32, #tpu.memory_space<vmem>>, vector<1x16xf32>
    tpu.vector_store %arg12[%c0_11, %c0_12], %10 {strides = array<i32>} : memref<1x16xf32, #tpu.memory_space<vmem>>, vector<1x16xf32>,
    %c0_13 = arith.constant 0 : index
    %c0_14 = arith.constant 0 : index
    %12 = vector.load %arg12[%c0_13, %c0_14] : memref<1x16xf32, #tpu.memory_space<vmem>>, vector<1x4xf32>
    %c0_15 = arith.constant 0 : index
    %c4 = arith.constant 4 : index
    %13 = vector.load %arg12[%c0_15, %c4] : memref<1x16xf32, #tpu.memory_space<vmem>>, vector<1x4xf32>
    %c0_16 = arith.constant 0 : index
    %c8 = arith.constant 8 : index
    %14 = vector.load %arg12[%c0_16, %c8] : memref<1x16xf32, #tpu.memory_space<vmem>>, vector<1x4xf32>
    %c0_17 = arith.constant 0 : index
    %c12 = arith.constant 12 : index
    %15 = vector.load %arg12[%c0_17, %c12] : memref<1x16xf32, #tpu.memory_space<vmem>>, vector<1x4xf32>
    %c0_18 = arith.constant 0 : index
    %c0_19 = arith.constant 0 : index
    %16 = vector.load %arg5[%c0_18, %c0_19] : memref<1x4xf32, #tpu.memory_space<vmem>>, vector<1x4xf32>
    %17 = math.exp %13 : vector<1x4xf32>
    %18 = math.sqrt %17 : vector<1x4xf32>
    %19 = arith.mulf %16, %18 : vector<1x4xf32>
    %20 = arith.addf %12, %19 : vector<1x4xf32>
    %c0_20 = arith.constant 0 : index
    %c0_21 = arith.constant 0 : index
    %21 = vector.load %arg6[%c0_20, %c0_21] : memref<1x4xf32, #tpu.memory_space<vmem>>, vector<1x4xf32>
    %22 = math.exp %15 : vector<1x4xf32>
    %23 = math.sqrt %22 : vector<1x4xf32>
    %24 = arith.mulf %21, %23 : vector<1x4xf32>
    %25 = arith.addf %14, %24 : vector<1x4xf32>
    %c0_22 = arith.constant 0 : index
    %c0_23 = arith.constant 0 : index
    %26 = vector.load %arg7[%c0_22, %c0_23] : memref<2x4xf32, #tpu.memory_space<vmem>>, vector<2x4xf32>
    %27 = vector.broadcast %20 : vector<1x4xf32> to vector<2x4xf32>
    %28 = arith.addf %26, %27 : vector<2x4xf32>
    %c0_24 = arith.constant 0 : index
    %c0_25 = arith.constant 0 : index
    %29 = vector.load %arg9[%c0_24, %c0_25] : memref<2x4xf32, #tpu.memory_space<vmem>>, vector<2x4xf32>
    tpu.vector_store %arg9[%c0_24, %c0_25], %28 {strides = array<i32>} : memref<2x4xf32, #tpu.memory_space<vmem>>, vector<2x4xf32>,
    %c0_26 = arith.constant 0 : index
    %c0_27 = arith.constant 0 : index
    %30 = vector.load %arg8[%c0_26, %c0_27] : memref<2x4xf32, #tpu.memory_space<vmem>>, vector<2x4xf32>
    %31 = vector.broadcast %25 : vector<1x4xf32> to vector<2x4xf32>
    %32 = arith.addf %30, %31 : vector<2x4xf32>
    %c0_28 = arith.constant 0 : index
    %c0_29 = arith.constant 0 : index
    %33 = vector.load %arg10[%c0_28, %c0_29] : memref<2x4xf32, #tpu.memory_space<vmem>>, vector<2x4xf32>
    tpu.vector_store %arg10[%c0_28, %c0_29], %32 {strides = array<i32>} : memref<2x4xf32, #tpu.memory_space<vmem>>, vector<2x4xf32>,
    %34 = math.exp %13 : vector<1x4xf32>
    %cst_30 = arith.constant -1.000000e+00 : f32
    %35 = math.exp %cst_30 : f32
    %cst_31 = arith.constant 1.000000e+00 : f32
    %36 = vector.broadcast %cst_31 : f32 to vector<1x4xf32>
    %37 = arith.subf %36, %13 : vector<1x4xf32>
    %38 = vector.shape_cast %37 : vector<1x4xf32> to vector<1x1x4xf32>
    %cst_32 = arith.constant dense<0.000000e+00> : vector<1xf32>
    %39 = vector.multi_reduction <add>, %38, %cst_32 [1, 2] : vector<1x1x4xf32> to vector<1xf32>
    %40 = vector.shape_cast %39 : vector<1xf32> to vector<1x1x1xf32>
    %41 = vector.extract %40[0, 0, 0] : f32 from vector<1x1x1xf32>
    %cst_33 = arith.constant 5.000000e-01 : f32
    %42 = arith.mulf %cst_33, %41 : f32
    %cst_34 = arith.constant -2.000000e+00 : f32
    %43 = arith.addf %cst_34, %42 : f32
    %44 = arith.mulf %12, %12 : vector<1x4xf32>
    %45 = arith.addf %34, %44 : vector<1x4xf32>
    %46 = vector.broadcast %35 : f32 to vector<1x4xf32>
    %47 = arith.mulf %45, %46 : vector<1x4xf32>
    %48 = vector.shape_cast %47 : vector<1x4xf32> to vector<1x1x4xf32>
    %cst_35 = arith.constant dense<0.000000e+00> : vector<1xf32>
    %49 = vector.multi_reduction <add>, %48, %cst_35 [1, 2] : vector<1x1x4xf32> to vector<1xf32>
    %50 = vector.shape_cast %49 : vector<1xf32> to vector<1x1x1xf32>
    %51 = vector.extract %50[0, 0, 0] : f32 from vector<1x1x1xf32>
    %cst_36 = arith.constant 5.000000e-01 : f32
    %52 = arith.mulf %cst_36, %51 : f32
    %53 = arith.addf %43, %52 : f32
    %c0_37 = arith.constant 0 : index
    %c0_38 = arith.constant 0 : index
    %54 = memref.load %arg11[%c0_37, %c0_38] : memref<1x1xf32, #tpu.memory_space<smem>>
    memref.store %53, %arg11[%c0_37, %c0_38] : memref<1x1xf32, #tpu.memory_space<smem>>
    return
  }
}

module attributes {stable_mosaic.version = 11 : i64} {
  func.func @_cbn_stat_norm_kernel(%arg0: i32, %arg1: i32, %arg2: memref<8x256xf32, #tpu.memory_space<vmem>>, %arg3: memref<8x1xf32, #tpu.memory_space<vmem>>, %arg4: memref<8x1xf32, #tpu.memory_space<vmem>>, %arg5: memref<8x256xf32, #tpu.memory_space<vmem>>, %arg6: memref<2xf32, #tpu.memory_space<smem>>) attributes {dimension_semantics = [#tpu.dimension_semantics<arbitrary>, #tpu.dimension_semantics<arbitrary>], iteration_bounds = array<i64: 2, 1>, scalar_prefetch = 0 : i64, scratch_operands = 1 : i64, tpu.core_type = #tpu.core_type<tc>, window_params = [{transform_indices = @transform_0, window_bounds = array<i64: 8, 256>}, {transform_indices = @transform_1, window_bounds = array<i64: 8, 1>}, {transform_indices = @transform_2, window_bounds = array<i64: 8, 1>}, {transform_indices = @transform_3, window_bounds = array<i64: 8, 256>}]} {
    %c0_i32 = arith.constant 0 : i32
    %0 = arith.cmpi eq, %arg0, %c0_i32 : i32
    %c0_i32_0 = arith.constant 0 : i32
    %1 = arith.cmpi eq, %arg1, %c0_i32_0 : i32
    %2 = arith.andi %0, %1 : i1
    %3 = arith.extui %2 : i1 to i32
    %c0_i32_1 = arith.constant 0 : i32
    %4 = arith.cmpi ne, %3, %c0_i32_1 : i32
    scf.if %4 {
      %cst = arith.constant 0.000000e+00 : f32
      %c0 = arith.constant 0 : index
      %11 = memref.load %arg6[%c0] : memref<2xf32, #tpu.memory_space<smem>>
      memref.store %cst, %arg6[%c0] : memref<2xf32, #tpu.memory_space<smem>>
      %cst_5 = arith.constant 0.000000e+00 : f32
      %c1 = arith.constant 1 : index
      %12 = memref.load %arg6[%c1] : memref<2xf32, #tpu.memory_space<smem>>
      memref.store %cst_5, %arg6[%c1] : memref<2xf32, #tpu.memory_space<smem>>
    } else {
    }
    %c0_i32_2 = arith.constant 0 : i32
    %5 = arith.cmpi eq, %arg0, %c0_i32_2 : i32
    %6 = arith.extui %5 : i1 to i32
    %c0_i32_3 = arith.constant 0 : i32
    %7 = arith.cmpi ne, %6, %c0_i32_3 : i32
    scf.if %7 {
      %c0 = arith.constant 0 : index
      %c0_5 = arith.constant 0 : index
      %11 = vector.load %arg2[%c0, %c0_5] : memref<8x256xf32, #tpu.memory_space<vmem>>, vector<8x256xf32>
      %c0_6 = arith.constant 0 : index
      %12 = memref.load %arg6[%c0_6] : memref<2xf32, #tpu.memory_space<smem>>
      %13 = vector.shape_cast %11 : vector<8x256xf32> to vector<1x8x256xf32>
      %cst = arith.constant dense<0.000000e+00> : vector<1xf32>
      %14 = vector.multi_reduction <add>, %13, %cst [1, 2] : vector<1x8x256xf32> to vector<1xf32>
      %15 = vector.shape_cast %14 : vector<1xf32> to vector<1x1x1xf32>
      %16 = vector.extract %15[0, 0, 0] : f32 from vector<1x1x1xf32>
      %17 = arith.addf %12, %16 : f32
      %c0_7 = arith.constant 0 : index
      %18 = memref.load %arg6[%c0_7] : memref<2xf32, #tpu.memory_space<smem>>
      memref.store %17, %arg6[%c0_7] : memref<2xf32, #tpu.memory_space<smem>>
      %c1 = arith.constant 1 : index
      %19 = memref.load %arg6[%c1] : memref<2xf32, #tpu.memory_space<smem>>
      %20 = arith.mulf %11, %11 : vector<8x256xf32>
      %21 = vector.shape_cast %20 : vector<8x256xf32> to vector<1x8x256xf32>
      %cst_8 = arith.constant dense<0.000000e+00> : vector<1xf32>
      %22 = vector.multi_reduction <add>, %21, %cst_8 [1, 2] : vector<1x8x256xf32> to vector<1xf32>
      %23 = vector.shape_cast %22 : vector<1xf32> to vector<1x1x1xf32>
      %24 = vector.extract %23[0, 0, 0] : f32 from vector<1x1x1xf32>
      %25 = arith.addf %19, %24 : f32
      %c1_9 = arith.constant 1 : index
      %26 = memref.load %arg6[%c1_9] : memref<2xf32, #tpu.memory_space<smem>>
      memref.store %25, %arg6[%c1_9] : memref<2xf32, #tpu.memory_space<smem>>
    } else {
    }
    %c1_i32 = arith.constant 1 : i32
    %8 = arith.cmpi eq, %arg0, %c1_i32 : i32
    %9 = arith.extui %8 : i1 to i32
    %c0_i32_4 = arith.constant 0 : i32
    %10 = arith.cmpi ne, %9, %c0_i32_4 : i32
    scf.if %10 {
      %c0 = arith.constant 0 : index
      %11 = memref.load %arg6[%c0] : memref<2xf32, #tpu.memory_space<smem>>
      %cst = arith.constant 2.048000e+03 : f32
      %12 = arith.divf %11, %cst : f32
      %c1 = arith.constant 1 : index
      %13 = memref.load %arg6[%c1] : memref<2xf32, #tpu.memory_space<smem>>
      %cst_5 = arith.constant 2.048000e+03 : f32
      %14 = arith.mulf %cst_5, %12 : f32
      %15 = arith.mulf %14, %12 : f32
      %16 = arith.subf %13, %15 : f32
      %cst_6 = arith.constant 2.047000e+03 : f32
      %17 = arith.divf %16, %cst_6 : f32
      %cst_7 = arith.constant 9.99999974E-6 : f32
      %18 = arith.addf %17, %cst_7 : f32
      %19 = math.rsqrt %18 : f32
      %c0_8 = arith.constant 0 : index
      %c0_9 = arith.constant 0 : index
      %20 = vector.load %arg3[%c0_8, %c0_9] : memref<8x1xf32, #tpu.memory_space<vmem>>, vector<8x1xf32>
      %21 = vector.broadcast %19 : f32 to vector<8x1xf32>
      %22 = arith.mulf %20, %21 : vector<8x1xf32>
      %c0_10 = arith.constant 0 : index
      %c0_11 = arith.constant 0 : index
      %23 = vector.load %arg4[%c0_10, %c0_11] : memref<8x1xf32, #tpu.memory_space<vmem>>, vector<8x1xf32>
      %24 = vector.broadcast %12 : f32 to vector<8x1xf32>
      %25 = arith.mulf %24, %22 : vector<8x1xf32>
      %26 = arith.subf %23, %25 : vector<8x1xf32>
      %c0_12 = arith.constant 0 : index
      %c0_13 = arith.constant 0 : index
      %27 = vector.load %arg2[%c0_12, %c0_13] : memref<8x256xf32, #tpu.memory_space<vmem>>, vector<8x256xf32>
      %28 = vector.broadcast %22 : vector<8x1xf32> to vector<8x256xf32>
      %29 = arith.mulf %27, %28 : vector<8x256xf32>
      %30 = vector.broadcast %26 : vector<8x1xf32> to vector<8x256xf32>
      %31 = arith.addf %29, %30 : vector<8x256xf32>
      %c0_14 = arith.constant 0 : index
      %c0_15 = arith.constant 0 : index
      %32 = vector.load %arg5[%c0_14, %c0_15] : memref<8x256xf32, #tpu.memory_space<vmem>>, vector<8x256xf32>
      tpu.vector_store %arg5[%c0_14, %c0_15], %31 {strides = array<i32>} : memref<8x256xf32, #tpu.memory_space<vmem>>, vector<8x256xf32>,
    } else {
    }
    return
  }
  func.func @transform_0(%arg0: i32, %arg1: i32) -> (i32, i32) {
    %c0_i32 = arith.constant 0 : i32
    %c0_i32_0 = arith.constant 0 : i32
    return %arg1, %c0_i32 : i32, i32
  }
  func.func @transform_1(%arg0: i32, %arg1: i32) -> (i32, i32) {
    %0 = arith.muli %arg1, %arg0 : i32
    %c0_i32 = arith.constant 0 : i32
    %c0_i32_0 = arith.constant 0 : i32
    return %0, %c0_i32 : i32, i32
  }
  func.func @transform_2(%arg0: i32, %arg1: i32) -> (i32, i32) {
    %0 = arith.muli %arg1, %arg0 : i32
    %c0_i32 = arith.constant 0 : i32
    %c0_i32_0 = arith.constant 0 : i32
    return %0, %c0_i32 : i32, i32
  }
  func.func @transform_3(%arg0: i32, %arg1: i32) -> (i32, i32) {
    %0 = arith.muli %arg1, %arg0 : i32
    %c0_i32 = arith.constant 0 : i32
    %c0_i32_0 = arith.constant 0 : i32
    return %0, %c0_i32 : i32, i32
  }
}

</mosaic_0001>

<llo_original>
// kernel: cbn_forward.5
$region0: #{cbn_forward.5}
  #allocation0 [shape = 'u32[]', space=smem, size = 0x4, offset = 0x4, fixed_abs, tag = 'smem constant byte address 0x4 - core index']
  #allocation1 [shape = 'u32[144,128]{1,0:T(1,128)}', space=vmem, size = 0x12000, scoped, tag = 'internal scratch']
  #allocation2 [shape = 'f32[2]{0:T(128)}', space=smem, size = 0x200, scoped, tag = 'scratch operand']
  %s0 = inlined_call_operand.vmem [shape: f32[8,256], index: 0, kind: input, shape index: {}]
  %s1 = inlined_call_operand.vmem [shape: f32[8,1], index: 1, kind: input, shape index: {}]
  %s2 = inlined_call_operand.vmem [shape: f32[8,1], index: 2, kind: input, shape index: {}]
  %s3 = inlined_call_operand.vmem [shape: f32[8,256], index: 3, kind: output, shape index: {}]
  %s4 = sld [smem:[#allocation0]]
  $region57: #{cbn_forward.5} parent=0
    _
  %s6 = ssub.s32 1, %s4
  %s7 = scalar_select 0, %s6, %s4
  loop: start=0, step=1, limit=4
  $region2: #{cbn_forward.5} parent=0 // loop_pre_header
    _
  $region3: #{cbn_forward.5} parent=0 // loop_header
    %s9 = sphi 0, %s13
    %p10 = scmp.ge.s32.totalorder %s9, 4
    %s16 = sphi 0, %s28
    %s17 = sphi 0, %s24
    %s18 = sphi 0, %s16
    %s19 = sphi 0, %s17
    %s20 = sphi 0, %s18
    %s21 = sphi 0, %s19
    %s31 = sphi 0, %s33
    %s34 = sphi 0, %s31
    %s35 = sphi 0, %s34
    %s51 = sphi 0, %s35
    %s59 = sphi 0, %s61
    %s62 = sphi 0, %s59
    %s63 = sphi 0, %s62
    %s79 = sphi 0, %s63
    %s87 = sphi 0, %s89
    %s90 = sphi 0, %s87
    %s91 = sphi 0, %s90
    %s107 = sphi 0, %s91
    %s115 = sphi 0, %s117
    %s118 = sphi 0, %s115
    %s119 = sphi 0, %s118
    %s135 = sphi 0, %s119
  $region4: #{cbn_forward.5} parent=0 // loop_header_branch
    %12 = sbr.rel (%p10) target = $region8
  $region5: #{cbn_forward.5} parent=0 // loop_body
    %s14 = ssub.s32 %s9, 1
    %s15 = ssub.s32 %s9, 2
    %s22 = sadd.s32 1, %s17
    %p23 = scmp.ge.s32.totalorder %s22, 1
    %s24 = scalar_select %p23, 0, %s22
    %s25 = sadd.s32 1, %s16
    %s26 = scalar_select %p23, %s25, %s16
    %p27 = scmp.ge.s32.totalorder %s26, 2
    %s28 = scalar_select %p27, 0, %s26
    %s29 = ssub.s32 %s17, %s24
    %p30 = scmp.eq.s32.totalorder %s29, 0
    %s32 = sadd.s32 %s31, 1
    %s33 = scalar_select %p30, %s31, %s32
    %p36 = pneg %p30
    %p37 = scmp.eq.s32.totalorder %s9, 1
    %p38 = por %p36, %p37
    %p39 = scmp.ne.s32.totalorder %s31, %s34
    %p40 = scmp.eq.s32.totalorder %s9, 0
    %p41 = por %p39, %p40
    %p42 = scmp.ne.s32.totalorder %s31, %s34
    %p43 = scmp.eq.s32.totalorder %s14, 1
    %p44 = por %p42, %p43
    %p45 = scmp.ne.s32.totalorder %s34, %s35
    %p46 = scmp.eq.s32.totalorder %s14, 0
    %p47 = por %p45, %p46
    %p48 = scmp.ne.s32.totalorder %s34, %s35
    %p49 = scmp.eq.s32.totalorder %s15, 1
    %p50 = por %p48, %p49
    %p52 = scmp.ne.s32.totalorder %s35, %s51
    %p53 = scmp.eq.s32.totalorder %s15, 0
    %p54 = por %p52, %p53
    %s55 = smul.u32 %s17, %s16
    %s56 = smul.u32 %s24, %s28
    %s57 = ssub.s32 %s55, %s56
    %p58 = scmp.eq.s32.totalorder %s57, 0
    %s60 = sadd.s32 %s59, 1
    %s61 = scalar_select %p58, %s59, %s60
    %p64 = pneg %p58
    %p65 = scmp.eq.s32.totalorder %s9, 1
    %p66 = por %p64, %p65
    %p67 = scmp.ne.s32.totalorder %s59, %s62
    %p68 = scmp.eq.s32.totalorder %s9, 0
    %p69 = por %p67, %p68
    %p70 = scmp.ne.s32.totalorder %s59, %s62
    %p71 = scmp.eq.s32.totalorder %s14, 1
    %p72 = por %p70, %p71
    %p73 = scmp.ne.s32.totalorder %s62, %s63
    %p74 = scmp.eq.s32.totalorder %s14, 0
    %p75 = por %p73, %p74
    %p76 = scmp.ne.s32.totalorder %s62, %s63
    %p77 = scmp.eq.s32.totalorder %s15, 1
    %p78 = por %p76, %p77
    %p80 = scmp.ne.s32.totalorder %s63, %s79
    %p81 = scmp.eq.s32.totalorder %s15, 0
    %p82 = por %p80, %p81
    %s83 = smul.u32 %s17, %s16
    %s84 = smul.u32 %s24, %s28
    %s85 = ssub.s32 %s83, %s84
    %p86 = scmp.eq.s32.totalorder %s85, 0
    %s88 = sadd.s32 %s87, 1
    %s89 = scalar_select %p86, %s87, %s88
    %p92 = pneg %p86
    %p93 = scmp.eq.s32.totalorder %s9, 1
    %p94 = por %p92, %p93
    %p95 = scmp.ne.s32.totalorder %s87, %s90
    %p96 = scmp.eq.s32.totalorder %s9, 0
    %p97 = por %p95, %p96
    %p98 = scmp.ne.s32.totalorder %s87, %s90
    %p99 = scmp.eq.s32.totalorder %s14, 1
    %p100 = por %p98, %p99
    %p101 = scmp.ne.s32.totalorder %s90, %s91
    %p102 = scmp.eq.s32.totalorder %s14, 0
    %p103 = por %p101, %p102
    %p104 = scmp.ne.s32.totalorder %s90, %s91
    %p105 = scmp.eq.s32.totalorder %s15, 1
    %p106 = por %p104, %p105
    %p108 = scmp.ne.s32.totalorder %s91, %s107
    %p109 = scmp.eq.s32.totalorder %s15, 0
    %p110 = por %p108, %p109
    %s111 = smul.u32 %s17, %s16
    %s112 = smul.u32 %s24, %s28
    %s113 = ssub.s32 %s111, %s112
    %p114 = scmp.eq.s32.totalorder %s113, 0
    %s116 = sadd.s32 %s115, 1
    %s117 = scalar_select %p114, %s115, %s116
    %p120 = pneg %p114
    %p121 = scmp.eq.s32.totalorder %s9, 1
    %p122 = por %p120, %p121
    %p123 = scmp.ne.s32.totalorder %s115, %s118
    %p124 = scmp.eq.s32.totalorder %s9, 0
    %p125 = por %p123, %p124
    %p126 = scmp.ne.s32.totalorder %s115, %s118
    %p127 = scmp.eq.s32.totalorder %s14, 1
    %p128 = por %p126, %p127
    %p129 = scmp.ne.s32.totalorder %s118, %s119
    %p130 = scmp.eq.s32.totalorder %s14, 0
    %p131 = por %p129, %p130
    %p132 = scmp.ne.s32.totalorder %s118, %s119
    %p133 = scmp.eq.s32.totalorder %s15, 1
    %p134 = por %p132, %p133
    %p136 = scmp.ne.s32.totalorder %s119, %s135
    %p137 = scmp.eq.s32.totalorder %s15, 0
    %p138 = por %p136, %p137
    %p139 = scmp.le.s32.totalorder 1, %s9
    %p140 = scmp.lt.s32.totalorder %s9, 3
    %p141 = pnand %p139, %p140
    %p142 = pneg %p141
    // Predicated region
    $region9: #{cbn_forward.5} parent=5 // pred_check
      _
    $region10: #{cbn_forward.5} parent=5 // pred_check_branch
      %144 = sbr.rel (%p141) target = $region12
    $region11: #{cbn_forward.5} parent=5 // pred_region
      %s145 = ssub.s32 %s9, 1
      // Predicated region
      $region13: #{cbn_forward.5} parent=11 // pred_check
        %p146 = pneg %p47
      $region14: #{cbn_forward.5} parent=11 // pred_check_branch
        %148 = sbr.rel (%p146) target = $region16
      $region15: #{cbn_forward.5} parent=11 // pred_region
        %p149 = scmp.lt.s32.totalorder %s19, 0
        %s150 = scalar_select %p149, %s19, 0
        %s151 = smul.addr %s150, 2
        %s152 = smul.addr %s151, 8
        %s153 = scalar_lea.vmem %s0, %s152
      $region16: #{cbn_forward.5} parent=11 // pred_fallthru
        _
    $region12: #{cbn_forward.5} parent=5 // pred_fallthru
      _
    %p154 = scmp.lt.s32.totalorder %s9, 2
    // Predicated region
    $region17: #{cbn_forward.5} parent=5 // pred_check
      %p155 = pneg %p154
    $region18: #{cbn_forward.5} parent=5 // pred_check_branch
      %157 = sbr.rel (%p155) target = $region20
    $region19: #{cbn_forward.5} parent=5 // pred_region
      // Predicated region
      $region21: #{cbn_forward.5} parent=19 // pred_check
        %p158 = pneg %p69
      $region22: #{cbn_forward.5} parent=19 // pred_check_branch
        %160 = sbr.rel (%p158) target = $region24
      $region23: #{cbn_forward.5} parent=19 // pred_region
        %s161 = smul.u32 %s17, %s16
        %p162 = scmp.lt.s32.totalorder %s161, 0
        %s163 = scalar_select %p162, %s161, 0
        %s164 = smul.addr %s163, 8
        %s165 = scalar_lea.vmem %s1, %s164
        %s166 = smul.u32 %s17, %s16
      $region24: #{cbn_forward.5} parent=19 // pred_fallthru
        _
      // Predicated region
      $region25: #{cbn_forward.5} parent=19 // pred_check
        %p167 = pneg %p97
      $region26: #{cbn_forward.5} parent=19 // pred_check_branch
        %169 = sbr.rel (%p167) target = $region28
      $region27: #{cbn_forward.5} parent=19 // pred_region
        %s170 = smul.u32 %s17, %s16
        %p171 = scmp.lt.s32.totalorder %s170, 0
        %s172 = scalar_select %p171, %s170, 0
        %s173 = smul.addr %s172, 8
        %s174 = scalar_lea.vmem %s2, %s173
        %s175 = smul.u32 %s17, %s16
      $region28: #{cbn_forward.5} parent=19 // pred_fallthru
        _
    $region20: #{cbn_forward.5} parent=5 // pred_fallthru
      _
    %p176 = scmp.le.s32.totalorder 1, %s9
    %p177 = scmp.lt.s32.totalorder %s9, 3
    %p178 = pnand %p176, %p177
    %p179 = pneg %p178
    // Predicated region
    $region29: #{cbn_forward.5} parent=5 // pred_check
      _
    $region30: #{cbn_forward.5} parent=5 // pred_check_branch
      %181 = sbr.rel (%p178) target = $region32
    $region31: #{cbn_forward.5} parent=5 // pred_region
      %s182 = ssub.s32 %s9, 1
      %p183 = scmp.lt.s32.totalorder %s19, 0
      %s184 = scalar_select %p183, %s19, 0
      %s185 = smul.addr %s184, 2
      %s186 = smul.addr %s185, 8
      %s187 = scalar_lea.vmem %s0, %s186
      %p188 = pneg %p47
      %p189 = pneg %p44
      %s190 = smul.u32 %s19, %s18
      %p191 = scmp.lt.s32.totalorder %s190, 0
      %s192 = scalar_select %p191, %s190, 0
      %s193 = smul.addr %s192, 8
      %s194 = scalar_lea.vmem %s1, %s193
      %p195 = pneg %p75
      %p196 = pneg %p72
      %s197 = smul.u32 %s19, %s18
      %p198 = scmp.lt.s32.totalorder %s197, 0
      %s199 = scalar_select %p198, %s197, 0
      %s200 = smul.addr %s199, 8
      %s201 = scalar_lea.vmem %s2, %s200
      %p202 = pneg %p103
      %p203 = pneg %p100
      %p204 = pneg %p131
      %p205 = pneg %p128
      %s206 = smul.u32 %s19, %s18
      %p207 = scmp.lt.s32.totalorder %s206, 0
      %s208 = scalar_select %p207, %s206, 0
      %s209 = smul.addr %s208, 2
      %s210 = smul.addr %s209, 8
      %s211 = scalar_lea.vmem %s3, %s210
      %p212 = scmp.lt.s32.totalorder %s19, 0
      %s213 = scalar_select %p212, %s19, 0
      %s214 = smul.addr %s213, 2
      %s215 = smul.addr %s214, 8
      %s216 = scalar_lea.vmem %s0, %s215
      %s217 = smul.u32 %s19, %s18
      %p218 = scmp.lt.s32.totalorder %s217, 0
      %s219 = scalar_select %p218, %s217, 0
      %s220 = smul.addr %s219, 8
      %s221 = scalar_lea.vmem %s1, %s220
      %s222 = smul.u32 %s19, %s18
      %s223 = smul.u32 %s19, %s18
      %p224 = scmp.lt.s32.totalorder %s223, 0
      %s225 = scalar_select %p224, %s223, 0
      %s226 = smul.addr %s225, 8
      %s227 = scalar_lea.vmem %s2, %s226
      %s228 = smul.u32 %s19, %s18
      %s229 = smul.u32 %s19, %s18
      %p230 = scmp.lt.s32.totalorder %s229, 0
      %s231 = scalar_select %p230, %s229, 0
      %s232 = smul.addr %s231, 2
      %s233 = smul.addr %s232, 8
      %s234 = scalar_lea.vmem %s3, %s233
      %s235 = smul.u32 %s19, %s18
      %p236 = scmp.eq.s32.totalorder %s18, 0
      %p237 = scmp.eq.s32.totalorder %s19, 0
      %p238 = pnand %p236, %p237
      %p239 = pneg %p238
      // Predicated region
      $region33: #{cbn_forward.5} parent=31 // pred_check
        _
      $region34: #{cbn_forward.5} parent=31 // pred_check_branch
        %241 = sbr.rel (%p238) target = $region36
      $region35: #{cbn_forward.5} parent=31 // pred_region
        %s242 = scalar_lea.smem [#allocation2], 0
        %243 = sst [smem:[%s242]] 0.0
        %s244 = scalar_lea.smem [#allocation2], 1
        %245 = sst [smem:[%s244]] 0.0
      $region36: #{cbn_forward.5} parent=31 // pred_fallthru
        _
      // Predicated region
      $region37: #{cbn_forward.5} parent=31 // pred_check
        %p246 = pneg %p236
      $region38: #{cbn_forward.5} parent=31 // pred_check_branch
        %248 = sbr.rel (%p246) target = $region40
      $region39: #{cbn_forward.5} parent=31 // pred_region
        %v249 = vld [vmem:[%s216] sm:$0xff]
        %v250 = vld [vmem:[%s216 + $0x8] sm:$0xff]
        %s251 = sld [smem:[#allocation2]]
        %v252 = vadd.f32 %v249, %v250
        %253 = vadd.xlane.f32.xlu0 %v252
        %v254 = vpop.xlane.xlu0 %253
        %v255 = vrot.slane %v254, 4
        %v256 = vadd.f32 %v254, %v255
        %v257 = vrot.slane %v256, 2
        %v258 = vadd.f32 %v256, %v257
        %v259 = vrot.slane %v258, 1
        %v260 = vadd.f32 %v258, %v259
        %s261 = vtos %v260
        %s262 = sadd.f32 %s251, %s261
        %s263 = scalar_lea.smem [#allocation2], 0
        %264 = sst [smem:[%s263]] %s262
        %s265 = sld [smem:[#allocation2 + $0x1]]
        %v266 = vmul.f32 %v249, %v249
        %v267 = vmul.f32 %v250, %v250
        %v268 = vadd.f32 %v266, %v267
        %269 = vadd.xlane.f32.xlu0 %v268
        %v270 = vpop.xlane.xlu0 %269
        %v271 = vrot.slane %v270, 4
        %v272 = vadd.f32 %v270, %v271
        %v273 = vrot.slane %v272, 2
        %v274 = vadd.f32 %v272, %v273
        %v275 = vrot.slane %v274, 1
        %v276 = vadd.f32 %v274, %v275
        %s277 = vtos %v276
        %s278 = sadd.f32 %s265, %s277
        %s279 = scalar_lea.smem [#allocation2], 1
        %280 = sst [smem:[%s279]] %s278
      $region40: #{cbn_forward.5} parent=31 // pred_fallthru
        _
      %p281 = scmp.eq.s32.totalorder %s18, 1
      // Predicated region
      $region41: #{cbn_forward.5} parent=31 // pred_check
        %p282 = pneg %p281
      $region42: #{cbn_forward.5} parent=31 // pred_check_branch
        %284 = sbr.rel (%p282) target = $region44
      $region43: #{cbn_forward.5} parent=31 // pred_region
        %s285 = sld [smem:[#allocation2]]
        %v286 = vrcp.pop 2048.0
        %s287 = vtos %v286
        %s288 = smul.f32 %s285, %s287
        %s289 = sld [smem:[#allocation2 + $0x1]]
        %s290 = smul.f32 %s288, 2048.0
        %s291 = smul.f32 %s290, %s288
        %s292 = ssub.f32 %s289, %s291
        %v293 = vrcp.pop 2047.0
        %s294 = vtos %v293
        %s295 = smul.f32 %s292, %s294
        %s296 = sadd.f32 %s295, 1e-05
        %v297 = vstv %s296
        %v298 = vrsqrt.pop %v297
        %s299 = vtos %v298
        %v300 = vld [vmem:[%s221] sm:$0xff]
        %v301 = vstv %s299
        %v302 = vmul.f32 %v300, %v301
        %v303 = vld [vmem:[%s227] sm:$0xff]
        %v304 = vstv %s288
        %v305 = vmul.f32 %v304, %v302
        %v306 = vsub.f32 %v303, %v305
        %v307 = vld [vmem:[%s216] sm:$0xff]
        %v308 = vld [vmem:[%s216 + $0x8] sm:$0xff]
        %310 = vset.pattern.permute.xlu0 0
        %311 = vperm.xlu0 %310, %v302
        %v312 = vpop.permute.xlu0 %311
        %v314 = vmul.f32 %v307, %v312
        %v315 = vmul.f32 %v308, %v312
        %317 = vset.pattern.permute.xlu0 0
        %318 = vperm.xlu0 %317, %v306
        %v319 = vpop.permute.xlu0 %318
        %v321 = vadd.f32 %v314, %v319
        %v322 = vadd.f32 %v315, %v319
        %323 = vst [vmem:[%s234] sm:$0xff] %v321
        %324 = vst [vmem:[%s234 + $0x8] sm:$0xff] %v322
      $region44: #{cbn_forward.5} parent=31 // pred_fallthru
        _
      %s325 = smul.u32 %s19, %s18
      %p326 = scmp.lt.s32.totalorder %s325, 0
      %s327 = scalar_select %p326, %s325, 0
      %s328 = smul.addr %s327, 2
      %s329 = smul.addr %s328, 8
      %s330 = scalar_lea.vmem %s3, %s329
      // Predicated region
      $region45: #{cbn_forward.5} parent=31 // pred_check
        %p331 = pneg %p128
      $region46: #{cbn_forward.5} parent=31 // pred_check_branch
        %333 = sbr.rel (%p331) target = $region48
      $region47: #{cbn_forward.5} parent=31 // pred_region
        %s334 = smul.u32 %s19, %s18
      $region48: #{cbn_forward.5} parent=31 // pred_fallthru
        _
    $region32: #{cbn_forward.5} parent=5 // pred_fallthru
      _
    %p335 = scmp.le.s32.totalorder 2, %s9
    // Predicated region
    $region49: #{cbn_forward.5} parent=5 // pred_check
      %p336 = pneg %p335
    $region50: #{cbn_forward.5} parent=5 // pred_check_branch
      %338 = sbr.rel (%p336) target = $region52
    $region51: #{cbn_forward.5} parent=5 // pred_region
      %s339 = ssub.s32 %s9, 2
      // Predicated region
      $region53: #{cbn_forward.5} parent=51 // pred_check
        %p340 = pneg %p134
      $region54: #{cbn_forward.5} parent=51 // pred_check_branch
        %342 = sbr.rel (%p340) target = $region56
      $region55: #{cbn_forward.5} parent=51 // pred_region
        %s343 = smul.u32 %s21, %s20
        %p344 = scmp.lt.s32.totalorder %s343, 0
        %s345 = scalar_select %p344, %s343, 0
        %s346 = smul.addr %s345, 2
        %s347 = smul.addr %s346, 8
        %s348 = scalar_lea.vmem %s3, %s347
      $region56: #{cbn_forward.5} parent=51 // pred_fallthru
        _
    $region52: #{cbn_forward.5} parent=5 // pred_fallthru
      _
  $region6: #{cbn_forward.5} parent=0 // loop_footer
    %s13 = sadd.s32 1, %s9
  $region7: #{cbn_forward.5} parent=0 // loop_footer_branch
    %8 = sbr.rel target = $region3
  $region8: #{cbn_forward.5} parent=0 // loop_exit
    _

// kernel: cbn_forward.4
$region0: #{cbn_forward.4}
  #allocation0 [shape = 'u32[]', space=smem, size = 0x4, offset = 0x4, fixed_abs, tag = 'smem constant byte address 0x4 - core index']
  #allocation1 [shape = 'u32[144,128]{1,0:T(1,128)}', space=vmem, size = 0x12000, scoped, tag = 'internal scratch']
  #allocation2 [shape = 'f32[1,16]{1,0:T(1,128)}', space=vmem, size = 0x200, scoped, tag = 'scratch operand']
  %s0 = inlined_call_operand.vmem [shape: f32[1,16], index: 0, kind: input, shape index: {}]
  %s1 = inlined_call_operand.vmem [shape: f32[16,128], index: 1, kind: input, shape index: {}]
  %s2 = inlined_call_operand.vmem [shape: f32[1,128], index: 2, kind: input, shape index: {}]
  %s3 = inlined_call_operand.vmem [shape: f32[128,16], index: 3, kind: input, shape index: {}]
  %s4 = inlined_call_operand.vmem [shape: f32[1,16], index: 4, kind: input, shape index: {}]
  %s5 = inlined_call_operand.vmem [shape: f32[1,4], index: 5, kind: input, shape index: {}]
  %s6 = inlined_call_operand.vmem [shape: f32[1,4], index: 6, kind: input, shape index: {}]
  %s7 = inlined_call_operand.vmem [shape: f32[2,4], index: 7, kind: input, shape index: {}]
  %s8 = inlined_call_operand.vmem [shape: f32[2,4], index: 8, kind: input, shape index: {}]
  %s9 = inlined_call_operand.vmem [shape: f32[2,4], index: 9, kind: output, shape index: {0}]
  %s10 = inlined_call_operand.vmem [shape: f32[2,4], index: 10, kind: output, shape index: {1}]
  %s11 = inlined_call_operand.hbm [shape: f32[1,1], index: 11, kind: output, shape index: {2}]
  %12 = xla_tuple %s9, %s10, %s11
  %s13 = sld [smem:[#allocation0]]
  $region62: #{cbn_forward.4} parent=0
    _
  %s15 = ssub.s32 1, %s13
  %s16 = scalar_select 0, %s15, %s13
  $region1: #{cbn_forward.4} parent=0
    #allocation3 [shape = 'u8[512]{0}', space=smem, size = 0x200, scoped, tag = 'output window, operand 2, single buffered']
    #allocation4 [shape = 's32[1]{0}', space=sflag, size = 0x4, scoped, tag = 'scoped memory for cbn_forward.4']
    %17 = vsyncpa [#allocation4], 0
    // Predicated region
    $region2: #{cbn_forward.4} parent=1 // pred_check
      _
    $region3: #{cbn_forward.4} parent=1 // pred_check_branch
      %19 = sbr.rel (0) target = $region5
    $region4: #{cbn_forward.4} parent=1 // pred_region
      _
    $region5: #{cbn_forward.4} parent=1 // pred_fallthru
      _
    // Predicated region
    $region6: #{cbn_forward.4} parent=1 // pred_check
      _
    $region7: #{cbn_forward.4} parent=1 // pred_check_branch
      %21 = sbr.rel (0) target = $region9
    $region8: #{cbn_forward.4} parent=1 // pred_region
      _
    $region9: #{cbn_forward.4} parent=1 // pred_fallthru
      _
    // Predicated region
    $region10: #{cbn_forward.4} parent=1 // pred_check
      _
    $region11: #{cbn_forward.4} parent=1 // pred_check_branch
      %23 = sbr.rel (0) target = $region13
    $region12: #{cbn_forward.4} parent=1 // pred_region
      _
    $region13: #{cbn_forward.4} parent=1 // pred_fallthru
      _
    // Predicated region
    $region14: #{cbn_forward.4} parent=1 // pred_check
      _
    $region15: #{cbn_forward.4} parent=1 // pred_check_branch
      %25 = sbr.rel (0) target = $region17
    $region16: #{cbn_forward.4} parent=1 // pred_region
      _
    $region17: #{cbn_forward.4} parent=1 // pred_fallthru
      _
    // Predicated region
    $region18: #{cbn_forward.4} parent=1 // pred_check
      _
    $region19: #{cbn_forward.4} parent=1 // pred_check_branch
      %27 = sbr.rel (0) target = $region21
    $region20: #{cbn_forward.4} parent=1 // pred_region
      _
    $region21: #{cbn_forward.4} parent=1 // pred_fallthru
      _
    // Predicated region
    $region22: #{cbn_forward.4} parent=1 // pred_check
      _
    $region23: #{cbn_forward.4} parent=1 // pred_check_branch
      %29 = sbr.rel (0) target = $region25
    $region24: #{cbn_forward.4} parent=1 // pred_region
      _
    $region25: #{cbn_forward.4} parent=1 // pred_fallthru
      _
    // Predicated region
    $region26: #{cbn_forward.4} parent=1 // pred_check
      _
    $region27: #{cbn_forward.4} parent=1 // pred_check_branch
      %31 = sbr.rel (0) target = $region29
    $region28: #{cbn_forward.4} parent=1 // pred_region
      _
    $region29: #{cbn_forward.4} parent=1 // pred_fallthru
      _
    // Predicated region
    $region30: #{cbn_forward.4} parent=1 // pred_check
      _
    $region31: #{cbn_forward.4} parent=1 // pred_check_branch
      %33 = sbr.rel (0) target = $region33
    $region32: #{cbn_forward.4} parent=1 // pred_region
      _
    $region33: #{cbn_forward.4} parent=1 // pred_fallthru
      _
    // Predicated region
    $region34: #{cbn_forward.4} parent=1 // pred_check
      _
    $region35: #{cbn_forward.4} parent=1 // pred_check_branch
      %35 = sbr.rel (0) target = $region37
    $region36: #{cbn_forward.4} parent=1 // pred_region
      _
    $region37: #{cbn_forward.4} parent=1 // pred_fallthru
      _
    %v36 = vld [vmem:[%s0] sm:$0x1]
    %v37 = vld [vmem:[%s1] sm:$0xff]
    %v38 = vld [vmem:[%s1 + $0x8] sm:$0xff]
    %v39 = vld [vmem:[%s2] sm:$0x1]
    %vm40 = vcmask 130048
    %v42 = vsel %vm40, %v36, 0
    %44 = vmatprep.subr.mxu0 0.0
    %45 = vmatpush1.msra.mxu0 %v37
    %46 = vmatprep.subr.mxu0 0.0
    %47 = vmatpush1.msra.mxu0 %v38
    %48 = vmatprep.subr.mxu0 0.0
    %49 = vmatpush1.msra.mxu0 0.0
    %50 = vmatprep.subr.mxu0 0.0
    %51 = vmatpush1.msra.mxu0 0.0
    %52 = vmatprep.subr.mxu0 0.0
    %53 = vmatpush1.msra.mxu0 0.0
    %54 = vmatprep.subr.mxu0 0.0
    %55 = vmatpush1.msra.mxu0 0.0
    %56 = vmatprep.subr.mxu0 0.0
    %57 = vmatpush1.msra.mxu0 0.0
    %58 = vmatprep.subr.mxu0 0.0
    %59 = vmatpush1.msra.mxu0 0.0
    %60 = vmatprep.subr.mxu0 0.0
    %61 = vmatpush1.msra.mxu0 0.0
    %62 = vmatprep.subr.mxu0 0.0
    %63 = vmatpush1.msra.mxu0 0.0
    %64 = vmatprep.subr.mxu0 0.0
    %65 = vmatpush1.msra.mxu0 0.0
    %66 = vmatprep.subr.mxu0 0.0
    %67 = vmatpush1.msra.mxu0 0.0
    %68 = vmatprep.subr.mxu0 0.0
    %69 = vmatpush1.msra.mxu0 0.0
    %70 = vmatprep.subr.mxu0 0.0
    %71 = vmatpush1.msra.mxu0 0.0
    %72 = vmatprep.subr.mxu0 0.0
    %73 = vmatpush1.msra.mxu0 0.0
    %74 = vmatprep.subr.mxu0 0.0
    %75 = vmatpush1.msra.mxu0 0.0
    %76 = vmatprep.subr.mxu0 0.0
    %77 = vmatpush1.msra.mxu0 0.0
    %78 = vmatprep.subr.mxu0 0.0
    %79 = vmatpush1.msra.mxu0 0.0
    %80 = vmatprep.subr.mxu0 0.0
    %81 = vmatpush1.msra.mxu0 0.0
    %82 = vmatprep.subr.mxu0 0.0
    %83 = vmatpush1.msra.mxu0 0.0
    %84 = vmatprep.subr.mxu0 0.0
    %85 = vmatpush1.msra.mxu0 0.0
    %86 = vmatprep.subr.mxu0 0.0
    %87 = vmatpush1.msra.mxu0 0.0
    %88 = vmatprep.subr.mxu0 0.0
    %89 = vmatpush1.msra.mxu0 0.0
    %90 = vmatprep.subr.mxu0 0.0
    %91 = vmatpush1.msra.mxu0 0.0
    %92 = vmatprep.subr.mxu0 0.0
    %93 = vmatpush1.msra.mxu0 0.0
    %94 = vmatprep.subr.mxu0 0.0
    %95 = vmatpush1.msra.mxu0 0.0
    %96 = vmatprep.subr.mxu0 0.0
    %97 = vmatpush1.msra.mxu0 0.0
    %98 = vmatprep.subr.mxu0 0.0
    %99 = vmatpush1.msra.mxu0 0.0
    %100 = vmatprep.subr.mxu0 0.0
    %101 = vmatpush1.msra.mxu0 0.0
    %102 = vmatprep.subr.mxu0 0.0
    %103 = vmatpush1.msra.mxu0 0.0
    %104 = vmatprep.subr.mxu0 0.0
    %105 = vmatpush1.msra.mxu0 0.0
    %106 = vmatprep.subr.mxu0 0.0
    %107 = vmatpush1.msra.mxu0 0.0
    %108 = vmatprep.mubr.f32.mxu0 0.0
    %109 = vmatmul.mubr.f32.gmra.mrb[0].mxu0 %v42
    %v110 = vpop.f32.mrb[0].mxu0
    %v111 = vadd.f32 %v39, %v110
    %v112 = vpop.f32.mrb[0].mxu0
    %113 = vdwg.mxu0
    %v114 = vmax.f32 %v111, 0.0
    %v115 = vld [vmem:[%s3] sm:$0xff]
    %v116 = vld [vmem:[%s3 + $0x8] sm:$0xff]
    %v117 = vld [vmem:[%s3 + $0x10] sm:$0xff]
    %v118 = vld [vmem:[%s3 + $0x18] sm:$0xff]
    %v119 = vld [vmem:[%s3 + $0x20] sm:$0xff]
    %v120 = vld [vmem:[%s3 + $0x28] sm:$0xff]
    %v121 = vld [vmem:[%s3 + $0x30] sm:$0xff]
    %v122 = vld [vmem:[%s3 + $0x38] sm:$0xff]
    %v123 = vld [vmem:[%s3 + $0x40] sm:$0xff]
    %v124 = vld [vmem:[%s3 + $0x48] sm:$0xff]
    %v125 = vld [vmem:[%s3 + $0x50] sm:$0xff]
    %v126 = vld [vmem:[%s3 + $0x58] sm:$0xff]
    %v127 = vld [vmem:[%s3 + $0x60] sm:$0xff]
    %v128 = vld [vmem:[%s3 + $0x68] sm:$0xff]
    %v129 = vld [vmem:[%s3 + $0x70] sm:$0xff]
    %v130 = vld [vmem:[%s3 + $0x78] sm:$0xff]
    %v131 = vld [vmem:[%s4] sm:$0x1]
    %132 = vmatprep.subr.mxu0 0.0
    %133 = vmatpush1.msra.mxu0 %v115
    %134 = vmatprep.subr.mxu0 0.0
    %135 = vmatpush1.msra.mxu0 %v116
    %136 = vmatprep.subr.mxu0 0.0
    %137 = vmatpush1.msra.mxu0 %v117
    %138 = vmatprep.subr.mxu0 0.0
    %139 = vmatpush1.msra.mxu0 %v118
    %140 = vmatprep.subr.mxu0 0.0
    %141 = vmatpush1.msra.mxu0 %v119
    %142 = vmatprep.subr.mxu0 0.0
    %143 = vmatpush1.msra.mxu0 %v120
    %144 = vmatprep.subr.mxu0 0.0
    %145 = vmatpush1.msra.mxu0 %v121
    %146 = vmatprep.subr.mxu0 0.0
    %147 = vmatpush1.msra.mxu0 %v122
    %148 = vmatprep.subr.mxu0 0.0
    %149 = vmatpush1.msra.mxu0 %v123
    %150 = vmatprep.subr.mxu0 0.0
    %151 = vmatpush1.msra.mxu0 %v124
    %152 = vmatprep.subr.mxu0 0.0
    %153 = vmatpush1.msra.mxu0 %v125
    %154 = vmatprep.subr.mxu0 0.0
    %155 = vmatpush1.msra.mxu0 %v126
    %156 = vmatprep.subr.mxu0 0.0
    %157 = vmatpush1.msra.mxu0 %v127
    %158 = vmatprep.subr.mxu0 0.0
    %159 = vmatpush1.msra.mxu0 %v128
    %160 = vmatprep.subr.mxu0 0.0
    %161 = vmatpush1.msra.mxu0 %v129
    %162 = vmatprep.subr.mxu0 0.0
    %163 = vmatpush1.msra.mxu0 %v130
    %164 = vmatprep.subr.mxu0 0.0
    %165 = vmatpush1.msra.mxu0 0.0
    %166 = vmatprep.subr.mxu0 0.0
    %167 = vmatpush1.msra.mxu0 0.0
    %168 = vmatprep.subr.mxu0 0.0
    %169 = vmatpush1.msra.mxu0 0.0
    %170 = vmatprep.subr.mxu0 0.0
    %171 = vmatpush1.msra.mxu0 0.0
    %172 = vmatprep.subr.mxu0 0.0
    %173 = vmatpush1.msra.mxu0 0.0
    %174 = vmatprep.subr.mxu0 0.0
    %175 = vmatpush1.msra.mxu0 0.0
    %176 = vmatprep.subr.mxu0 0.0
    %177 = vmatpush1.msra.mxu0 0.0
    %178 = vmatprep.subr.mxu0 0.0
    %179 = vmatpush1.msra.mxu0 0.0
    %180 = vmatprep.subr.mxu0 0.0
    %181 = vmatpush1.msra.mxu0 0.0
    %182 = vmatprep.subr.mxu0 0.0
    %183 = vmatpush1.msra.mxu0 0.0
    %184 = vmatprep.subr.mxu0 0.0
    %185 = vmatpush1.msra.mxu0 0.0
    %186 = vmatprep.subr.mxu0 0.0
    %187 = vmatpush1.msra.mxu0 0.0
    %188 = vmatprep.subr.mxu0 0.0
    %189 = vmatpush1.msra.mxu0 0.0
    %190 = vmatprep.subr.mxu0 0.0
    %191 = vmatpush1.msra.mxu0 0.0
    %192 = vmatprep.subr.mxu0 0.0
    %193 = vmatpush1.msra.mxu0 0.0
    %194 = vmatprep.subr.mxu0 0.0
    %195 = vmatpush1.msra.mxu0 0.0
    %196 = vmatprep.mubr.f32.mxu0 0.0
    %197 = vmatmul.mubr.f32.gmra.mrb[0].mxu0 %v114
    %v198 = vpop.f32.mrb[0].mxu0
    %v199 = vadd.f32 %v131, %v198
    %v200 = vpop.f32.mrb[0].mxu0
    %201 = vdwg.mxu0
    %vm202 = vcmask 122880
    %203 = vst.msk [vmem:[#allocation2] sm:$0x1] %vm202, %v199
    %v204 = vld [vmem:[#allocation2] sm:$0x1]
    %v205 = vld [vmem:[%s5] sm:$0x1]
    %v206 = vmul.f32 %v204, 1.442695
    %v207 = vpow.pop %v206
    %v208 = vrsqrt.pop %v207
    %v209 = vmul.f32 %v207, %v208
    %vm210 = vcmp.eq.f32.partialorder %v207, inf
    %v211 = vsel %vm210, %v207, %v209
    %vm212 = vcmp.eq.f32.partialorder %v207, 0.0
    %v213 = vand.u32 %v207, 2147483648
    %v214 = vsel %vm212, %v213, %v211
    %216 = vrot.lane.b32.xlu0 %v214, 124
    %v217 = vpop.permute.xlu0 %216
    %v219 = vmul.f32 %v205, %v217
    %v220 = vadd.f32 %v204, %v219
    %v221 = vld [vmem:[%s6] sm:$0x1]
    %222 = vrot.lane.b32.xlu0 %v214, 116
    %v223 = vpop.permute.xlu0 %222
    %v225 = vmul.f32 %v221, %v223
    %227 = vrot.lane.b32.xlu0 %v225, 8
    %v228 = vpop.permute.xlu0 %227
    %v230 = vadd.f32 %v204, %v228
    %v231 = vld [vmem:[%s7] sm:$0x3]
    %v233 = vlaneseq
    %v234 = vshrl.u32 %v233, 7
    %v235 = vsub.s32 0, %v234
    %v236 = vrot.slane %v220, %v235
    %v238 = vadd.f32 %v231, %v236
    %vm239 = vcmask 25600
    %240 = vst.msk [vmem:[%s9] sm:$0x3] %vm239, %v238
    %v241 = vld [vmem:[%s8] sm:$0x3]
    %v243 = vlaneseq
    %v244 = vshrl.u32 %v243, 7
    %v245 = vsub.s32 0, %v244
    %v246 = vrot.slane %v230, %v245
    %247 = vrot.lane.b32.xlu0 %v246, 120
    %v248 = vpop.permute.xlu0 %247
    %v250 = vadd.f32 %v241, %v248
    %251 = vst.msk [vmem:[%s10] sm:$0x3] %vm239, %v250
    %v252 = vsub.f32 1.0, %v204
    %v254 = vlaneseq
    %v255 = vshrl.u32 %v254, 7
    %v256 = vsub.s32 0, %v255
    %v257 = vrot.slane %v252, %v256
    %258 = vrot.lane.b32.xlu0 %v257, 124
    %v259 = vpop.permute.xlu0 %258
    %vm261 = vcmask 24576
    %v262 = vsel %vm261, %v259, 0.0
    %263 = vadd.xlane.f32.xlu0 %v262
    %v264 = vpop.xlane.xlu0 %263
    %v265 = vrot.slane %v264, 4
    %v266 = vadd.f32 %v264, %v265
    %v267 = vrot.slane %v266, 2
    %v268 = vadd.f32 %v266, %v267
    %v269 = vrot.slane %v268, 1
    %v270 = vadd.f32 %v268, %v269
    %s271 = vtos %v270
    %s272 = smul.f32 %s271, 0.5
    %s273 = sadd.f32 %s272, -2.0
    %v274 = vmul.f32 %v204, %v204
    %276 = vrot.lane.b32.xlu0 %v274, 4
    %v277 = vpop.permute.xlu0 %276
    %v279 = vadd.f32 %v207, %v277
    %v280 = vmul.f32 %v279, 0.36787945
    %v282 = vlaneseq
    %v283 = vshrl.u32 %v282, 7
    %v284 = vsub.s32 0, %v283
    %v285 = vrot.slane %v280, %v284
    %286 = vrot.lane.b32.xlu0 %v285, 124
    %v287 = vpop.permute.xlu0 %286
    %v289 = vsel %vm261, %v287, 0.0
    %290 = vadd.xlane.f32.xlu0 %v289
    %v291 = vpop.xlane.xlu0 %290
    %v292 = vrot.slane %v291, 4
    %v293 = vadd.f32 %v291, %v292
    %v294 = vrot.slane %v293, 2
    %v295 = vadd.f32 %v293, %v294
    %v296 = vrot.slane %v295, 1
    %v297 = vadd.f32 %v295, %v296
    %s298 = vtos %v297
    %s299 = smul.f32 %s298, 0.5
    %s300 = sadd.f32 %s273, %s299
    %s301 = scalar_lea.smem [#allocation3], 0
    %302 = sst [smem:[%s301]] %s300
    // Predicated region
    $region38: #{cbn_forward.4} parent=1 // pred_check
      _
    $region39: #{cbn_forward.4} parent=1 // pred_check_branch
      %304 = sbr.rel (0) target = $region41
    $region40: #{cbn_forward.4} parent=1 // pred_region
      _
    $region41: #{cbn_forward.4} parent=1 // pred_fallthru
      _
    // Predicated region
    $region42: #{cbn_forward.4} parent=1 // pred_check
      _
    $region43: #{cbn_forward.4} parent=1 // pred_check_branch
      %306 = sbr.rel (0) target = $region45
    $region44: #{cbn_forward.4} parent=1 // pred_region
      _
    $region45: #{cbn_forward.4} parent=1 // pred_fallthru
      _
    // Predicated region
    $region46: #{cbn_forward.4} parent=1 // pred_check
      _
    $region47: #{cbn_forward.4} parent=1 // pred_check_branch
      %308 = sbr.rel (0) target = $region49
    $region48: #{cbn_forward.4} parent=1 // pred_region
      %s310 = ssub.s32 16, 16
      %311 = vsyncadd [#allocation4], %s310
      %314 = dma.smem_to_hbm [#allocation3], 16, %s11, [#allocation4]
    $region49: #{cbn_forward.4} parent=1 // pred_fallthru
      _
    // Predicated region
    $region50: #{cbn_forward.4} parent=1 // pred_check
      _
    $region51: #{cbn_forward.4} parent=1 // pred_check_branch
      %316 = sbr.rel (0) target = $region53
    $region52: #{cbn_forward.4} parent=1 // pred_region
      _
    $region53: #{cbn_forward.4} parent=1 // pred_fallthru
      _
    // Predicated region
    $region54: #{cbn_forward.4} parent=1 // pred_check
      _
    $region55: #{cbn_forward.4} parent=1 // pred_check_branch
      %318 = sbr.rel (0) target = $region57
    $region56: #{cbn_forward.4} parent=1 // pred_region
      _
    $region57: #{cbn_forward.4} parent=1 // pred_fallthru
      _
    // Predicated region
    $region58: #{cbn_forward.4} parent=1 // pred_check
      _
    $region59: #{cbn_forward.4} parent=1 // pred_check_branch
      %320 = sbr.rel (0) target = $region61
    $region60: #{cbn_forward.4} parent=1 // pred_region
      %321 = dma.done [#allocation4], 16
    $region61: #{cbn_forward.4} parent=1 // pred_fallthru
      _
    %322 = sfence
    %323 = vsyncpa [#allocation4], 1

</llo_original>
